<compile_context>
chip_gen: v7x
topology: tpu7x:2x2x1
jax: 0.10.0
libtpu: 0.0.40
codegen_flags: <defaults>
</compile_context>

<pallas_src>
import functools
import math

import jax
import jax.numpy as jnp
from jax.experimental import pallas as pl
from jax.experimental.pallas import tpu as pltpu

_EPS_NORM_SQ = 1e-24          # (1e-12)^2 : F.normalize per-tensor eps, squared
_EPS_DENOM = 1e-6             # clamp on (pos + neg)
_LOSS_CAP = -math.log(1e-6)   # clamp(ratio, min=1e-6) caps the per-pixel loss here
_CLIP = 50.0                  # reference clamps cos/tau to [-50, 50] before exp


def _vmem_budgets():
    """(per-grid-step tile byte budget, vmem_limit_bytes), sized to the chip."""
    phys = 64 * 1024 * 1024                       # conservative default (v7x)
    try:
        phys = int(pltpu.get_tpu_info().vmem_capacity_bytes)
    except Exception:
        pass
    vmem_limit = min(phys * 3 // 4, 100 * 1024 * 1024)   # 48 MiB v7x / 96 MiB v5e,v6e
    tile_budget = min(phys * 3 // 8, 48 * 1024 * 1024)   # 24 MiB v7x / 48 MiB v5e,v6e
    return tile_budget, vmem_limit


def _round_up(x, m):
    return ((x + m - 1) // m) * m


def _tile_bytes(c, s_tile, itemsize):
    """VMEM footprint of one grid step (double buffers + cast copies + temps)."""
    p = s_tile * 128
    b = 4 * 2 * c * p * itemsize          # 4 double-buffered input tiles
    if itemsize < 4:
        b += 4 * c * p * 4                # whole-tile f32 cast copies (bf16 inputs)
    b += 2 * 3 * p * 4                    # double-buffered logits output tile
    b += 16 * p * 4                       # norms / dots / exp temporaries
    b += 2 * 3 * 8 * 128 * 4              # resident negp output block
    return b


def _choose_layout(hw, c, itemsize, budget):
    """Pick (S, S_TILE, HW_pad): pixels viewed as (S, 128), tiled (S_TILE, 128)."""
    s1 = pl.cdiv(hw, 128)
    if _tile_bytes(c, s1, itemsize) <= budget:
        return s1, s1, s1 * 128           # single full-extent pixel tile (always legal)
    # Real tiling needed: pad S to a multiple of 8 so every tile is (8k, 128)-legal,
    # then take the largest multiple-of-8 divisor of S that fits the budget.
    s = _round_up(s1, 8)
    best = 8
    cand = 16
    while cand <= s:
        if s % cand == 0 and _tile_bytes(c, cand, itemsize) <= budget:
            best = cand
        cand += 8
    return s, best, s * 128


def _contrastive_kernel(q1_ref, q2_ref, q3_ref, y_ref, logits_ref, negp_ref, *,
                        inv_tau, s_tile, hw, hw_pad):
    """Per-pixel positive logits + per-batch partial negative exp-sums."""
    t = pl.program_id(1)

    q1 = q1_ref[0].astype(jnp.float32)    # (C, S_TILE, 128)
    q2 = q2_ref[0].astype(jnp.float32)
    q3 = q3_ref[0].astype(jnp.float32)
    y = y_ref[0].astype(jnp.float32)

    def inv_norm(a):
        # Channel axis is leading (non-minor) -> plain VPU adds, rsqrt on the EUP.
        return jax.lax.rsqrt(jnp.maximum(jnp.sum(a * a, axis=0), _EPS_NORM_SQ))

    inv1, inv2, inv3, invy = inv_norm(q1), inv_norm(q2), inv_norm(q3), inv_norm(y)

    def logit(a, b, ia, ib):
        cos = jnp.sum(a * b, axis=0) * ia * ib              # (S_TILE, 128)
        return jnp.clip(cos * inv_tau, -_CLIP, _CLIP)

    # Positive logits: direct sublane/lane-dense row stores (no concatenate).
    logits_ref[0, 0] = logit(q1, y, inv1, invy)
    logits_ref[0, 1] = logit(q2, y, inv2, invy)
    logits_ref[0, 2] = logit(q3, y, inv3, invy)

    # ---- negative-term partial sums, accumulated per (sublane, lane) ----
    @pl.when(t == 0)
    def _init():
        negp_ref[...] = jnp.zeros_like(negp_ref)

    if hw_pad != hw:   # trace-time branch: only emitted when zero-padding exists
        base = t * (s_tile * 128)
        row = jax.lax.broadcasted_iota(jnp.int32, (s_tile, 128), 0)
        col = jax.lax.broadcasted_iota(jnp.int32, (s_tile, 128), 1)
        valid = (base + row * 128 + col) < hw
    else:
        valid = None

    pairs = ((q1, q3, inv1, inv3), (q2, q1, inv2, inv1), (q3, q2, inv3, inv2))
    for k, (a, b, ia, ib) in enumerate(pairs):
        e = jnp.exp(logit(a, b, ia, ib))                     # (S_TILE, 128)
        if valid is not None:
            e = jnp.where(valid, e, 0.0)
        if s_tile % 8 == 0:
            if s_tile > 8:
                # Layout-preserving fold: reduction over a leading axis = VPU adds.
                e = jnp.sum(e.reshape(s_tile // 8, 8, 128), axis=0)
            negp_ref[0, k] += e                              # (8, 128) RMW, resident
        else:
            # Only reachable for a single full-extent tile -> one tiny reduce total.
            negp_ref[0, k, 0:1, :] += jnp.sum(e, axis=0, keepdims=True)


def contrastive_loss(q_F1, q_F2, q_F3, pseudo_Yf, temperature=0.07):
    tau = float(temperature)
    n = min(q_F1.shape[0], q_F2.shape[0], q_F3.shape[0], pseudo_Yf.shape[0])
    _, c, h, w = q_F1.shape
    hw = h * w
    itemsize = jnp.dtype(q_F1.dtype).itemsize

    budget, vmem_limit = _vmem_budgets()
    s, s_tile, hw_pad = _choose_layout(hw, c, itemsize, budget)

    def prep(x):
        x = x[:n].reshape(n, c, hw)          # free view of contiguous NCHW
        if hw_pad != hw:
            x = jnp.pad(x, ((0, 0), (0, 0), (0, hw_pad - hw)))
        return x.reshape(n, c, s, 128)       # pixels -> (sublane-groups, lanes)

    a1, a2, a3, ay = prep(q_F1), prep(q_F2), prep(q_F3), prep(pseudo_Yf)

    num_tiles = s // s_tile
    grid = (n, num_tiles)

    in_spec = pl.BlockSpec((1, c, s_tile, 128), lambda i, t: (i, 0, t, 0))
    logits_spec = pl.BlockSpec((1, 3, s_tile, 128), lambda i, t: (i, 0, t, 0))
    negp_spec = pl.BlockSpec((1, 3, 8, 128), lambda i, t: (i, 0, 0, 0))

    cost = pl.CostEstimate(
        flops=(20 * c + 48) * n * hw_pad,
        transcendentals=7 * n * hw_pad,
        bytes_accessed=4 * c * n * hw_pad * itemsize + 3 * n * hw_pad * 4
        + n * 3 * 8 * 128 * 4)

    logits, negp = pl.pallas_call(
        functools.partial(_contrastive_kernel, inv_tau=1.0 / tau,
                          s_tile=s_tile, hw=hw, hw_pad=hw_pad),
        grid=grid,
        in_specs=[in_spec, in_spec, in_spec, in_spec],
        out_specs=[logits_spec, negp_spec],
        out_shape=[
            jax.ShapeDtypeStruct((n, 3, s, 128), jnp.float32),
            jax.ShapeDtypeStruct((n, 3, 8, 128), jnp.float32),
        ],
        compiler_params=pltpu.CompilerParams(
            dimension_semantics=("parallel", "arbitrary"),
            vmem_limit_bytes=vmem_limit),
        cost_estimate=cost,
    )(a1, a2, a3, ay)

    # Fused XLA epilogue (trivial compute; replaces the old overhead-bound pass 2).
    neg = jnp.sum(negp, axis=(0, 2, 3))                  # (3,): global over batch+pixels
    logits_flat = logits.reshape(n, 3, s * 128)
    if hw_pad != hw:
        logits_flat = logits_flat[:, :, :hw]             # drop padded pixels
    denom = jnp.maximum(jnp.exp(logits_flat) + neg[None, :, None], _EPS_DENOM)
    # == -log(clamp(pos / max(pos + neg, 1e-6), min=1e-6)),  pos = exp(logit)
    loss_px = jnp.minimum(jnp.log(denom) - logits_flat, _LOSS_CAP)
    return jnp.sum(loss_px) / float(n * hw)


def _reference(q_F1, q_F2, q_F3, pseudo_Yf, tau=0.07):
    """Faithful JAX port of the PyTorch module (normalize -> cos -> exp -> log)."""
    bs = min(q_F1.shape[0], pseudo_Yf.shape[0], q_F2.shape[0], q_F3.shape[0])

    def norm(x):
        nrm = jnp.sqrt(jnp.sum(x * x, axis=1, keepdims=True))
        return x / jnp.maximum(nrm, 1e-12)

    q1, q2, q3, y = (norm(q_F1[:bs]), norm(q_F2[:bs]),
                     norm(q_F3[:bs]), norm(pseudo_Yf[:bs]))

    def cexp(a, b):
        return jnp.exp(jnp.clip(jnp.sum(a * b, axis=1) / tau, -50.0, 50.0))

    pos1, pos2, pos3 = cexp(q1, y), cexp(q2, y), cexp(q3, y)
    neg1, neg2, neg3 = cexp(q1, q3).sum(), cexp(q2, q1).sum(), cexp(q3, q2).sum()

    def lossf(p, ng):
        return -jnp.log(jnp.maximum(p / jnp.maximum(p + ng, 1e-6), 1e-6))

    return (lossf(pos1, neg1) + lossf(pos2, neg2) + lossf(pos3, neg3)).mean()


if __name__ == "__main__":
    key = jax.random.PRNGKey(0)
    k1, k2, k3, k4 = jax.random.split(key, 4)
    N, C, H, W = 2, 4, 16, 16   # HW = 256 -> 2 pixel sublane-groups of 128 lanes
    q_F1 = jax.random.normal(k1, (N, C, H, W), dtype=jnp.float32)
    q_F2 = jax.random.normal(k2, (N, C, H, W), dtype=jnp.float32)
    q_F3 = jax.random.normal(k3, (N, C, H, W), dtype=jnp.float32)
    pseudo_Yf = jax.random.normal(k4, (N, C, H, W), dtype=jnp.float32)

    loss = jax.jit(contrastive_loss)(q_F1, q_F2, q_F3, pseudo_Yf)
    loss = jax.block_until_ready(loss)

    ref = _reference(q_F1, q_F2, q_F3, pseudo_Yf)
    assert jnp.allclose(loss, ref, rtol=1e-4, atol=1e-4), (loss, ref)
    print("KERNEL_OK")
</pallas_src>

<mosaic_0001>
module attributes {stable_mosaic.version = 11 : i64} {
  func.func @_contrastive_kernel(%arg0: i32, %arg1: i32, %arg2: memref<1x4x2x128xf32, #tpu.memory_space<vmem>>, %arg3: memref<1x4x2x128xf32, #tpu.memory_space<vmem>>, %arg4: memref<1x4x2x128xf32, #tpu.memory_space<vmem>>, %arg5: memref<1x4x2x128xf32, #tpu.memory_space<vmem>>, %arg6: memref<1x3x2x128xf32, #tpu.memory_space<vmem>>, %arg7: memref<1x3x8x128xf32, #tpu.memory_space<vmem>>) attributes {dimension_semantics = [#tpu.dimension_semantics<parallel>, #tpu.dimension_semantics<arbitrary>], iteration_bounds = array<i64: 2, 1>, scalar_prefetch = 0 : i64, scratch_operands = 0 : i64, tpu.core_type = #tpu.core_type<tc>, window_params = [{transform_indices = @transform_0, window_bounds = array<i64: 1, 4, 2, 128>}, {transform_indices = @transform_1, window_bounds = array<i64: 1, 4, 2, 128>}, {transform_indices = @transform_2, window_bounds = array<i64: 1, 4, 2, 128>}, {transform_indices = @transform_3, window_bounds = array<i64: 1, 4, 2, 128>}, {transform_indices = @transform_4, window_bounds = array<i64: 1, 3, 2, 128>}, {transform_indices = @transform_5, window_bounds = array<i64: 1, 3, 8, 128>}]} {
    %c0 = arith.constant 0 : index
    %c0_0 = arith.constant 0 : index
    %c0_1 = arith.constant 0 : index
    %c0_2 = arith.constant 0 : index
    %0 = vector.load %arg2[%c0, %c0_0, %c0_1, %c0_2] : memref<1x4x2x128xf32, #tpu.memory_space<vmem>>, vector<1x4x2x128xf32>
    %1 = vector.shape_cast %0 : vector<1x4x2x128xf32> to vector<4x2x128xf32>
    %c0_3 = arith.constant 0 : index
    %c0_4 = arith.constant 0 : index
    %c0_5 = arith.constant 0 : index
    %c0_6 = arith.constant 0 : index
    %2 = vector.load %arg3[%c0_3, %c0_4, %c0_5, %c0_6] : memref<1x4x2x128xf32, #tpu.memory_space<vmem>>, vector<1x4x2x128xf32>
    %3 = vector.shape_cast %2 : vector<1x4x2x128xf32> to vector<4x2x128xf32>
    %c0_7 = arith.constant 0 : index
    %c0_8 = arith.constant 0 : index
    %c0_9 = arith.constant 0 : index
    %c0_10 = arith.constant 0 : index
    %4 = vector.load %arg4[%c0_7, %c0_8, %c0_9, %c0_10] : memref<1x4x2x128xf32, #tpu.memory_space<vmem>>, vector<1x4x2x128xf32>
    %5 = vector.shape_cast %4 : vector<1x4x2x128xf32> to vector<4x2x128xf32>
    %c0_11 = arith.constant 0 : index
    %c0_12 = arith.constant 0 : index
    %c0_13 = arith.constant 0 : index
    %c0_14 = arith.constant 0 : index
    %6 = vector.load %arg5[%c0_11, %c0_12, %c0_13, %c0_14] : memref<1x4x2x128xf32, #tpu.memory_space<vmem>>, vector<1x4x2x128xf32>
    %7 = vector.shape_cast %6 : vector<1x4x2x128xf32> to vector<4x2x128xf32>
    %8 = arith.mulf %1, %1 : vector<4x2x128xf32>
    %cst = arith.constant dense<0.000000e+00> : vector<2x128xf32>
    %9 = vector.multi_reduction <add>, %8, %cst [0] : vector<4x2x128xf32> to vector<2x128xf32>
    %cst_15 = arith.constant 1.000000e-24 : f32
    %10 = vector.broadcast %cst_15 : f32 to vector<2x128xf32>
    %11 = arith.maximumf %9, %10 : vector<2x128xf32>
    %12 = math.rsqrt %11 : vector<2x128xf32>
    %13 = arith.mulf %3, %3 : vector<4x2x128xf32>
    %cst_16 = arith.constant dense<0.000000e+00> : vector<2x128xf32>
    %14 = vector.multi_reduction <add>, %13, %cst_16 [0] : vector<4x2x128xf32> to vector<2x128xf32>
    %cst_17 = arith.constant 1.000000e-24 : f32
    %15 = vector.broadcast %cst_17 : f32 to vector<2x128xf32>
    %16 = arith.maximumf %14, %15 : vector<2x128xf32>
    %17 = math.rsqrt %16 : vector<2x128xf32>
    %18 = arith.mulf %5, %5 : vector<4x2x128xf32>
    %cst_18 = arith.constant dense<0.000000e+00> : vector<2x128xf32>
    %19 = vector.multi_reduction <add>, %18, %cst_18 [0] : vector<4x2x128xf32> to vector<2x128xf32>
    %cst_19 = arith.constant 1.000000e-24 : f32
    %20 = vector.broadcast %cst_19 : f32 to vector<2x128xf32>
    %21 = arith.maximumf %19, %20 : vector<2x128xf32>
    %22 = math.rsqrt %21 : vector<2x128xf32>
    %23 = arith.mulf %7, %7 : vector<4x2x128xf32>
    %cst_20 = arith.constant dense<0.000000e+00> : vector<2x128xf32>
    %24 = vector.multi_reduction <add>, %23, %cst_20 [0] : vector<4x2x128xf32> to vector<2x128xf32>
    %cst_21 = arith.constant 1.000000e-24 : f32
    %25 = vector.broadcast %cst_21 : f32 to vector<2x128xf32>
    %26 = arith.maximumf %24, %25 : vector<2x128xf32>
    %27 = math.rsqrt %26 : vector<2x128xf32>
    %28 = arith.mulf %1, %7 : vector<4x2x128xf32>
    %cst_22 = arith.constant dense<0.000000e+00> : vector<2x128xf32>
    %29 = vector.multi_reduction <add>, %28, %cst_22 [0] : vector<4x2x128xf32> to vector<2x128xf32>
    %30 = arith.mulf %29, %12 : vector<2x128xf32>
    %31 = arith.mulf %30, %27 : vector<2x128xf32>
    %cst_23 = arith.constant 14.2857141 : f32
    %32 = vector.broadcast %cst_23 : f32 to vector<2x128xf32>
    %33 = arith.mulf %31, %32 : vector<2x128xf32>
    %cst_24 = arith.constant -5.000000e+01 : f32
    %cst_25 = arith.constant 5.000000e+01 : f32
    %34 = vector.broadcast %cst_24 : f32 to vector<2x128xf32>
    %35 = arith.maximumf %34, %33 : vector<2x128xf32>
    %36 = vector.broadcast %cst_25 : f32 to vector<2x128xf32>
    %37 = arith.minimumf %36, %35 : vector<2x128xf32>
    %c0_26 = arith.constant 0 : index
    %c0_27 = arith.constant 0 : index
    %c0_28 = arith.constant 0 : index
    %c0_29 = arith.constant 0 : index
    %38 = vector.load %arg6[%c0_26, %c0_27, %c0_28, %c0_29] : memref<1x3x2x128xf32, #tpu.memory_space<vmem>>, vector<1x1x2x128xf32>
    %39 = vector.shape_cast %38 : vector<1x1x2x128xf32> to vector<2x128xf32>
    %40 = vector.shape_cast %37 : vector<2x128xf32> to vector<1x1x2x128xf32>
    tpu.vector_store %arg6[%c0_26, %c0_27, %c0_28, %c0_29], %40 {strides = array<i32>} : memref<1x3x2x128xf32, #tpu.memory_space<vmem>>, vector<1x1x2x128xf32>,
    %41 = arith.mulf %3, %7 : vector<4x2x128xf32>
    %cst_30 = arith.constant dense<0.000000e+00> : vector<2x128xf32>
    %42 = vector.multi_reduction <add>, %41, %cst_30 [0] : vector<4x2x128xf32> to vector<2x128xf32>
    %43 = arith.mulf %42, %17 : vector<2x128xf32>
    %44 = arith.mulf %43, %27 : vector<2x128xf32>
    %cst_31 = arith.constant 14.2857141 : f32
    %45 = vector.broadcast %cst_31 : f32 to vector<2x128xf32>
    %46 = arith.mulf %44, %45 : vector<2x128xf32>
    %cst_32 = arith.constant -5.000000e+01 : f32
    %cst_33 = arith.constant 5.000000e+01 : f32
    %47 = vector.broadcast %cst_32 : f32 to vector<2x128xf32>
    %48 = arith.maximumf %47, %46 : vector<2x128xf32>
    %49 = vector.broadcast %cst_33 : f32 to vector<2x128xf32>
    %50 = arith.minimumf %49, %48 : vector<2x128xf32>
    %c0_34 = arith.constant 0 : index
    %c1 = arith.constant 1 : index
    %c0_35 = arith.constant 0 : index
    %c0_36 = arith.constant 0 : index
    %51 = vector.load %arg6[%c0_34, %c1, %c0_35, %c0_36] : memref<1x3x2x128xf32, #tpu.memory_space<vmem>>, vector<1x1x2x128xf32>
    %52 = vector.shape_cast %51 : vector<1x1x2x128xf32> to vector<2x128xf32>
    %53 = vector.shape_cast %50 : vector<2x128xf32> to vector<1x1x2x128xf32>
    tpu.vector_store %arg6[%c0_34, %c1, %c0_35, %c0_36], %53 {strides = array<i32>} : memref<1x3x2x128xf32, #tpu.memory_space<vmem>>, vector<1x1x2x128xf32>,
    %54 = arith.mulf %5, %7 : vector<4x2x128xf32>
    %cst_37 = arith.constant dense<0.000000e+00> : vector<2x128xf32>
    %55 = vector.multi_reduction <add>, %54, %cst_37 [0] : vector<4x2x128xf32> to vector<2x128xf32>
    %56 = arith.mulf %55, %22 : vector<2x128xf32>
    %57 = arith.mulf %56, %27 : vector<2x128xf32>
    %cst_38 = arith.constant 14.2857141 : f32
    %58 = vector.broadcast %cst_38 : f32 to vector<2x128xf32>
    %59 = arith.mulf %57, %58 : vector<2x128xf32>
    %cst_39 = arith.constant -5.000000e+01 : f32
    %cst_40 = arith.constant 5.000000e+01 : f32
    %60 = vector.broadcast %cst_39 : f32 to vector<2x128xf32>
    %61 = arith.maximumf %60, %59 : vector<2x128xf32>
    %62 = vector.broadcast %cst_40 : f32 to vector<2x128xf32>
    %63 = arith.minimumf %62, %61 : vector<2x128xf32>
    %c0_41 = arith.constant 0 : index
    %c2 = arith.constant 2 : index
    %c0_42 = arith.constant 0 : index
    %c0_43 = arith.constant 0 : index
    %64 = vector.load %arg6[%c0_41, %c2, %c0_42, %c0_43] : memref<1x3x2x128xf32, #tpu.memory_space<vmem>>, vector<1x1x2x128xf32>
    %65 = vector.shape_cast %64 : vector<1x1x2x128xf32> to vector<2x128xf32>
    %66 = vector.shape_cast %63 : vector<2x128xf32> to vector<1x1x2x128xf32>
    tpu.vector_store %arg6[%c0_41, %c2, %c0_42, %c0_43], %66 {strides = array<i32>} : memref<1x3x2x128xf32, #tpu.memory_space<vmem>>, vector<1x1x2x128xf32>,
    %c0_i32 = arith.constant 0 : i32
    %67 = arith.cmpi eq, %arg1, %c0_i32 : i32
    %68 = arith.extui %67 : i1 to i32
    %c0_i32_44 = arith.constant 0 : i32
    %69 = arith.cmpi ne, %68, %c0_i32_44 : i32
    scf.if %69 {
      %cst_84 = arith.constant 0.000000e+00 : f32
      %127 = vector.broadcast %cst_84 : f32 to vector<1x3x8x128xf32>
      %c0_85 = arith.constant 0 : index
      %c0_86 = arith.constant 0 : index
      %c0_87 = arith.constant 0 : index
      %c0_88 = arith.constant 0 : index
      %128 = vector.load %arg7[%c0_85, %c0_86, %c0_87, %c0_88] : memref<1x3x8x128xf32, #tpu.memory_space<vmem>>, vector<1x3x8x128xf32>
      tpu.vector_store %arg7[%c0_85, %c0_86, %c0_87, %c0_88], %127 {strides = array<i32>} : memref<1x3x8x128xf32, #tpu.memory_space<vmem>>, vector<1x3x8x128xf32>,
    } else {
    }
    %70 = arith.mulf %1, %5 : vector<4x2x128xf32>
    %cst_45 = arith.constant dense<0.000000e+00> : vector<2x128xf32>
    %71 = vector.multi_reduction <add>, %70, %cst_45 [0] : vector<4x2x128xf32> to vector<2x128xf32>
    %72 = arith.mulf %71, %12 : vector<2x128xf32>
    %73 = arith.mulf %72, %22 : vector<2x128xf32>
    %cst_46 = arith.constant 14.2857141 : f32
    %74 = vector.broadcast %cst_46 : f32 to vector<2x128xf32>
    %75 = arith.mulf %73, %74 : vector<2x128xf32>
    %cst_47 = arith.constant -5.000000e+01 : f32
    %cst_48 = arith.constant 5.000000e+01 : f32
    %76 = vector.broadcast %cst_47 : f32 to vector<2x128xf32>
    %77 = arith.maximumf %76, %75 : vector<2x128xf32>
    %78 = vector.broadcast %cst_48 : f32 to vector<2x128xf32>
    %79 = arith.minimumf %78, %77 : vector<2x128xf32>
    %80 = math.exp %79 : vector<2x128xf32>
    %c0_49 = arith.constant 0 : index
    %c0_50 = arith.constant 0 : index
    %c0_51 = arith.constant 0 : index
    %c0_52 = arith.constant 0 : index
    %81 = vector.load %arg7[%c0_49, %c0_50, %c0_51, %c0_52] : memref<1x3x8x128xf32, #tpu.memory_space<vmem>>, vector<1x1x1x128xf32>
    %82 = vector.shape_cast %81 : vector<1x1x1x128xf32> to vector<1x128xf32>
    %cst_53 = arith.constant dense<0.000000e+00> : vector<128xf32>
    %83 = vector.multi_reduction <add>, %80, %cst_53 [0] : vector<2x128xf32> to vector<128xf32>
    %84 = vector.shape_cast %83 : vector<128xf32> to vector<1x128xf32>
    %85 = arith.addf %82, %84 : vector<1x128xf32>
    %c0_54 = arith.constant 0 : index
    %c0_55 = arith.constant 0 : index
    %c0_56 = arith.constant 0 : index
    %c0_57 = arith.constant 0 : index
    %86 = vector.load %arg7[%c0_54, %c0_55, %c0_56, %c0_57] : memref<1x3x8x128xf32, #tpu.memory_space<vmem>>, vector<1x1x1x128xf32>
    %87 = vector.shape_cast %86 : vector<1x1x1x128xf32> to vector<1x128xf32>
    %88 = vector.shape_cast %85 : vector<1x128xf32> to vector<1x1x1x128xf32>
    tpu.vector_store %arg7[%c0_54, %c0_55, %c0_56, %c0_57], %88 {strides = array<i32>} : memref<1x3x8x128xf32, #tpu.memory_space<vmem>>, vector<1x1x1x128xf32>,
    %89 = arith.mulf %3, %1 : vector<4x2x128xf32>
    %cst_58 = arith.constant dense<0.000000e+00> : vector<2x128xf32>
    %90 = vector.multi_reduction <add>, %89, %cst_58 [0] : vector<4x2x128xf32> to vector<2x128xf32>
    %91 = arith.mulf %90, %17 : vector<2x128xf32>
    %92 = arith.mulf %91, %12 : vector<2x128xf32>
    %cst_59 = arith.constant 14.2857141 : f32
    %93 = vector.broadcast %cst_59 : f32 to vector<2x128xf32>
    %94 = arith.mulf %92, %93 : vector<2x128xf32>
    %cst_60 = arith.constant -5.000000e+01 : f32
    %cst_61 = arith.constant 5.000000e+01 : f32
    %95 = vector.broadcast %cst_60 : f32 to vector<2x128xf32>
    %96 = arith.maximumf %95, %94 : vector<2x128xf32>
    %97 = vector.broadcast %cst_61 : f32 to vector<2x128xf32>
    %98 = arith.minimumf %97, %96 : vector<2x128xf32>
    %99 = math.exp %98 : vector<2x128xf32>
    %c0_62 = arith.constant 0 : index
    %c1_63 = arith.constant 1 : index
    %c0_64 = arith.constant 0 : index
    %c0_65 = arith.constant 0 : index
    %100 = vector.load %arg7[%c0_62, %c1_63, %c0_64, %c0_65] : memref<1x3x8x128xf32, #tpu.memory_space<vmem>>, vector<1x1x1x128xf32>
    %101 = vector.shape_cast %100 : vector<1x1x1x128xf32> to vector<1x128xf32>
    %cst_66 = arith.constant dense<0.000000e+00> : vector<128xf32>
    %102 = vector.multi_reduction <add>, %99, %cst_66 [0] : vector<2x128xf32> to vector<128xf32>
    %103 = vector.shape_cast %102 : vector<128xf32> to vector<1x128xf32>
    %104 = arith.addf %101, %103 : vector<1x128xf32>
    %c0_67 = arith.constant 0 : index
    %c1_68 = arith.constant 1 : index
    %c0_69 = arith.constant 0 : index
    %c0_70 = arith.constant 0 : index
    %105 = vector.load %arg7[%c0_67, %c1_68, %c0_69, %c0_70] : memref<1x3x8x128xf32, #tpu.memory_space<vmem>>, vector<1x1x1x128xf32>
    %106 = vector.shape_cast %105 : vector<1x1x1x128xf32> to vector<1x128xf32>
    %107 = vector.shape_cast %104 : vector<1x128xf32> to vector<1x1x1x128xf32>
    tpu.vector_store %arg7[%c0_67, %c1_68, %c0_69, %c0_70], %107 {strides = array<i32>} : memref<1x3x8x128xf32, #tpu.memory_space<vmem>>, vector<1x1x1x128xf32>,
    %108 = arith.mulf %5, %3 : vector<4x2x128xf32>
    %cst_71 = arith.constant dense<0.000000e+00> : vector<2x128xf32>
    %109 = vector.multi_reduction <add>, %108, %cst_71 [0] : vector<4x2x128xf32> to vector<2x128xf32>
    %110 = arith.mulf %109, %22 : vector<2x128xf32>
    %111 = arith.mulf %110, %17 : vector<2x128xf32>
    %cst_72 = arith.constant 14.2857141 : f32
    %112 = vector.broadcast %cst_72 : f32 to vector<2x128xf32>
    %113 = arith.mulf %111, %112 : vector<2x128xf32>
    %cst_73 = arith.constant -5.000000e+01 : f32
    %cst_74 = arith.constant 5.000000e+01 : f32
    %114 = vector.broadcast %cst_73 : f32 to vector<2x128xf32>
    %115 = arith.maximumf %114, %113 : vector<2x128xf32>
    %116 = vector.broadcast %cst_74 : f32 to vector<2x128xf32>
    %117 = arith.minimumf %116, %115 : vector<2x128xf32>
    %118 = math.exp %117 : vector<2x128xf32>
    %c0_75 = arith.constant 0 : index
    %c2_76 = arith.constant 2 : index
    %c0_77 = arith.constant 0 : index
    %c0_78 = arith.constant 0 : index
    %119 = vector.load %arg7[%c0_75, %c2_76, %c0_77, %c0_78] : memref<1x3x8x128xf32, #tpu.memory_space<vmem>>, vector<1x1x1x128xf32>
    %120 = vector.shape_cast %119 : vector<1x1x1x128xf32> to vector<1x128xf32>
    %cst_79 = arith.constant dense<0.000000e+00> : vector<128xf32>
    %121 = vector.multi_reduction <add>, %118, %cst_79 [0] : vector<2x128xf32> to vector<128xf32>
    %122 = vector.shape_cast %121 : vector<128xf32> to vector<1x128xf32>
    %123 = arith.addf %120, %122 : vector<1x128xf32>
    %c0_80 = arith.constant 0 : index
    %c2_81 = arith.constant 2 : index
    %c0_82 = arith.constant 0 : index
    %c0_83 = arith.constant 0 : index
    %124 = vector.load %arg7[%c0_80, %c2_81, %c0_82, %c0_83] : memref<1x3x8x128xf32, #tpu.memory_space<vmem>>, vector<1x1x1x128xf32>
    %125 = vector.shape_cast %124 : vector<1x1x1x128xf32> to vector<1x128xf32>
    %126 = vector.shape_cast %123 : vector<1x128xf32> to vector<1x1x1x128xf32>
    tpu.vector_store %arg7[%c0_80, %c2_81, %c0_82, %c0_83], %126 {strides = array<i32>} : memref<1x3x8x128xf32, #tpu.memory_space<vmem>>, vector<1x1x1x128xf32>,
    return
  }
  func.func @transform_0(%arg0: i32, %arg1: i32) -> (i32, i32, i32, i32) {
    %c0_i32 = arith.constant 0 : i32
    %c0_i32_0 = arith.constant 0 : i32
    %c0_i32_1 = arith.constant 0 : i32
    return %arg0, %c0_i32, %arg1, %c0_i32_0 : i32, i32, i32, i32
  }
  func.func @transform_1(%arg0: i32, %arg1: i32) -> (i32, i32, i32, i32) {
    %c0_i32 = arith.constant 0 : i32
    %c0_i32_0 = arith.constant 0 : i32
    %c0_i32_1 = arith.constant 0 : i32
    return %arg0, %c0_i32, %arg1, %c0_i32_0 : i32, i32, i32, i32
  }
  func.func @transform_2(%arg0: i32, %arg1: i32) -> (i32, i32, i32, i32) {
    %c0_i32 = arith.constant 0 : i32
    %c0_i32_0 = arith.constant 0 : i32
    %c0_i32_1 = arith.constant 0 : i32
    return %arg0, %c0_i32, %arg1, %c0_i32_0 : i32, i32, i32, i32
  }
  func.func @transform_3(%arg0: i32, %arg1: i32) -> (i32, i32, i32, i32) {
    %c0_i32 = arith.constant 0 : i32
    %c0_i32_0 = arith.constant 0 : i32
    %c0_i32_1 = arith.constant 0 : i32
    return %arg0, %c0_i32, %arg1, %c0_i32_0 : i32, i32, i32, i32
  }
  func.func @transform_4(%arg0: i32, %arg1: i32) -> (i32, i32, i32, i32) {
    %c0_i32 = arith.constant 0 : i32
    %c0_i32_0 = arith.constant 0 : i32
    %c0_i32_1 = arith.constant 0 : i32
    return %arg0, %c0_i32, %arg1, %c0_i32_0 : i32, i32, i32, i32
  }
  func.func @transform_5(%arg0: i32, %arg1: i32) -> (i32, i32, i32, i32) {
    %c0_i32 = arith.constant 0 : i32
    %c0_i32_0 = arith.constant 0 : i32
    %c0_i32_1 = arith.constant 0 : i32
    %c0_i32_2 = arith.constant 0 : i32
    return %arg0, %c0_i32, %c0_i32_0, %c0_i32_1 : i32, i32, i32, i32
  }
}

</mosaic_0001>

<llo_original>
// kernel: contrastive_loss.1
$region0: #{contrastive_loss.1}
  #allocation0 [shape = 'u32[]', space=smem, size = 0x4, offset = 0x4, fixed_abs, tag = 'smem constant byte address 0x4 - core index']
  #allocation1 [shape = 'u32[144,128]{1,0:T(1,128)}', space=vmem, size = 0x12000, scoped, tag = 'internal scratch']
  %s0 = inlined_call_operand.vmem [shape: f32[2,4,2,128], index: 0, kind: input, shape index: {}]
  %s1 = inlined_call_operand.vmem [shape: f32[2,4,2,128], index: 1, kind: input, shape index: {}]
  %s2 = inlined_call_operand.vmem [shape: f32[2,4,2,128], index: 2, kind: input, shape index: {}]
  %s3 = inlined_call_operand.vmem [shape: f32[2,4,2,128], index: 3, kind: input, shape index: {}]
  %s4 = inlined_call_operand.vmem [shape: f32[2,3,2,128], index: 4, kind: output, shape index: {0}]
  %s5 = inlined_call_operand.vmem [shape: f32[2,3,8,128], index: 5, kind: output, shape index: {1}]
  %6 = xla_tuple %s4, %s5
  %s7 = sld [smem:[#allocation0]]
  $region61: #{contrastive_loss.1} parent=0
    _
  %s9 = ssub.s32 1, %s7
  %s10 = scalar_select 0, %s9, %s7
  loop: start=0, step=1, limit=4
  $region2: #{contrastive_loss.1} parent=0 // loop_pre_header
    _
  $region3: #{contrastive_loss.1} parent=0 // loop_header
    %s12 = sphi 0, %s16
    %p13 = scmp.ge.s32.totalorder %s12, 4
    %s19 = sphi 0, %s31
    %s20 = sphi 0, %s27
    %s21 = sphi 0, %s19
    %s22 = sphi 0, %s20
    %s23 = sphi 0, %s21
    %s24 = sphi 0, %s22
    %s36 = sphi 0, %s38
    %s39 = sphi 0, %s36
    %s40 = sphi 0, %s39
    %s56 = sphi 0, %s40
    %s64 = sphi 0, %s66
    %s67 = sphi 0, %s64
    %s68 = sphi 0, %s67
    %s84 = sphi 0, %s68
    %s92 = sphi 0, %s94
    %s95 = sphi 0, %s92
    %s96 = sphi 0, %s95
    %s112 = sphi 0, %s96
    %s120 = sphi 0, %s122
    %s123 = sphi 0, %s120
    %s124 = sphi 0, %s123
    %s140 = sphi 0, %s124
    %s148 = sphi 0, %s150
    %s151 = sphi 0, %s148
    %s152 = sphi 0, %s151
    %s168 = sphi 0, %s152
    %s174 = sphi 0, %s176
    %s177 = sphi 0, %s174
    %s178 = sphi 0, %s177
    %s194 = sphi 0, %s178
  $region4: #{contrastive_loss.1} parent=0 // loop_header_branch
    %15 = sbr.rel (%p13) target = $region8
  $region5: #{contrastive_loss.1} parent=0 // loop_body
    %s17 = ssub.s32 %s12, 1
    %s18 = ssub.s32 %s12, 2
    %s25 = sadd.s32 1, %s20
    %p26 = scmp.ge.s32.totalorder %s25, 1
    %s27 = scalar_select %p26, 0, %s25
    %s28 = sadd.s32 1, %s19
    %s29 = scalar_select %p26, %s28, %s19
    %p30 = scmp.ge.s32.totalorder %s29, 2
    %s31 = scalar_select %p30, 0, %s29
    %s32 = ssub.s32 %s19, %s31
    %s33 = ssub.s32 %s20, %s27
    %s34 = sor.u32 %s32, %s33
    %p35 = scmp.eq.s32.totalorder %s34, 0
    %s37 = sadd.s32 %s36, 1
    %s38 = scalar_select %p35, %s36, %s37
    %p41 = pneg %p35
    %p42 = scmp.eq.s32.totalorder %s12, 1
    %p43 = por %p41, %p42
    %p44 = scmp.ne.s32.totalorder %s36, %s39
    %p45 = scmp.eq.s32.totalorder %s12, 0
    %p46 = por %p44, %p45
    %p47 = scmp.ne.s32.totalorder %s36, %s39
    %p48 = scmp.eq.s32.totalorder %s17, 1
    %p49 = por %p47, %p48
    %p50 = scmp.ne.s32.totalorder %s39, %s40
    %p51 = scmp.eq.s32.totalorder %s17, 0
    %p52 = por %p50, %p51
    %p53 = scmp.ne.s32.totalorder %s39, %s40
    %p54 = scmp.eq.s32.totalorder %s18, 1
    %p55 = por %p53, %p54
    %p57 = scmp.ne.s32.totalorder %s40, %s56
    %p58 = scmp.eq.s32.totalorder %s18, 0
    %p59 = por %p57, %p58
    %s60 = ssub.s32 %s19, %s31
    %s61 = ssub.s32 %s20, %s27
    %s62 = sor.u32 %s60, %s61
    %p63 = scmp.eq.s32.totalorder %s62, 0
    %s65 = sadd.s32 %s64, 1
    %s66 = scalar_select %p63, %s64, %s65
    %p69 = pneg %p63
    %p70 = scmp.eq.s32.totalorder %s12, 1
    %p71 = por %p69, %p70
    %p72 = scmp.ne.s32.totalorder %s64, %s67
    %p73 = scmp.eq.s32.totalorder %s12, 0
    %p74 = por %p72, %p73
    %p75 = scmp.ne.s32.totalorder %s64, %s67
    %p76 = scmp.eq.s32.totalorder %s17, 1
    %p77 = por %p75, %p76
    %p78 = scmp.ne.s32.totalorder %s67, %s68
    %p79 = scmp.eq.s32.totalorder %s17, 0
    %p80 = por %p78, %p79
    %p81 = scmp.ne.s32.totalorder %s67, %s68
    %p82 = scmp.eq.s32.totalorder %s18, 1
    %p83 = por %p81, %p82
    %p85 = scmp.ne.s32.totalorder %s68, %s84
    %p86 = scmp.eq.s32.totalorder %s18, 0
    %p87 = por %p85, %p86
    %s88 = ssub.s32 %s19, %s31
    %s89 = ssub.s32 %s20, %s27
    %s90 = sor.u32 %s88, %s89
    %p91 = scmp.eq.s32.totalorder %s90, 0
    %s93 = sadd.s32 %s92, 1
    %s94 = scalar_select %p91, %s92, %s93
    %p97 = pneg %p91
    %p98 = scmp.eq.s32.totalorder %s12, 1
    %p99 = por %p97, %p98
    %p100 = scmp.ne.s32.totalorder %s92, %s95
    %p101 = scmp.eq.s32.totalorder %s12, 0
    %p102 = por %p100, %p101
    %p103 = scmp.ne.s32.totalorder %s92, %s95
    %p104 = scmp.eq.s32.totalorder %s17, 1
    %p105 = por %p103, %p104
    %p106 = scmp.ne.s32.totalorder %s95, %s96
    %p107 = scmp.eq.s32.totalorder %s17, 0
    %p108 = por %p106, %p107
    %p109 = scmp.ne.s32.totalorder %s95, %s96
    %p110 = scmp.eq.s32.totalorder %s18, 1
    %p111 = por %p109, %p110
    %p113 = scmp.ne.s32.totalorder %s96, %s112
    %p114 = scmp.eq.s32.totalorder %s18, 0
    %p115 = por %p113, %p114
    %s116 = ssub.s32 %s19, %s31
    %s117 = ssub.s32 %s20, %s27
    %s118 = sor.u32 %s116, %s117
    %p119 = scmp.eq.s32.totalorder %s118, 0
    %s121 = sadd.s32 %s120, 1
    %s122 = scalar_select %p119, %s120, %s121
    %p125 = pneg %p119
    %p126 = scmp.eq.s32.totalorder %s12, 1
    %p127 = por %p125, %p126
    %p128 = scmp.ne.s32.totalorder %s120, %s123
    %p129 = scmp.eq.s32.totalorder %s12, 0
    %p130 = por %p128, %p129
    %p131 = scmp.ne.s32.totalorder %s120, %s123
    %p132 = scmp.eq.s32.totalorder %s17, 1
    %p133 = por %p131, %p132
    %p134 = scmp.ne.s32.totalorder %s123, %s124
    %p135 = scmp.eq.s32.totalorder %s17, 0
    %p136 = por %p134, %p135
    %p137 = scmp.ne.s32.totalorder %s123, %s124
    %p138 = scmp.eq.s32.totalorder %s18, 1
    %p139 = por %p137, %p138
    %p141 = scmp.ne.s32.totalorder %s124, %s140
    %p142 = scmp.eq.s32.totalorder %s18, 0
    %p143 = por %p141, %p142
    %s144 = ssub.s32 %s19, %s31
    %s145 = ssub.s32 %s20, %s27
    %s146 = sor.u32 %s144, %s145
    %p147 = scmp.eq.s32.totalorder %s146, 0
    %s149 = sadd.s32 %s148, 1
    %s150 = scalar_select %p147, %s148, %s149
    %p153 = pneg %p147
    %p154 = scmp.eq.s32.totalorder %s12, 1
    %p155 = por %p153, %p154
    %p156 = scmp.ne.s32.totalorder %s148, %s151
    %p157 = scmp.eq.s32.totalorder %s12, 0
    %p158 = por %p156, %p157
    %p159 = scmp.ne.s32.totalorder %s148, %s151
    %p160 = scmp.eq.s32.totalorder %s17, 1
    %p161 = por %p159, %p160
    %p162 = scmp.ne.s32.totalorder %s151, %s152
    %p163 = scmp.eq.s32.totalorder %s17, 0
    %p164 = por %p162, %p163
    %p165 = scmp.ne.s32.totalorder %s151, %s152
    %p166 = scmp.eq.s32.totalorder %s18, 1
    %p167 = por %p165, %p166
    %p169 = scmp.ne.s32.totalorder %s152, %s168
    %p170 = scmp.eq.s32.totalorder %s18, 0
    %p171 = por %p169, %p170
    %s172 = ssub.s32 %s19, %s31
    %p173 = scmp.eq.s32.totalorder %s172, 0
    %s175 = sadd.s32 %s174, 1
    %s176 = scalar_select %p173, %s174, %s175
    %p179 = pneg %p173
    %p180 = scmp.eq.s32.totalorder %s12, 1
    %p181 = por %p179, %p180
    %p182 = scmp.ne.s32.totalorder %s174, %s177
    %p183 = scmp.eq.s32.totalorder %s12, 0
    %p184 = por %p182, %p183
    %p185 = scmp.ne.s32.totalorder %s174, %s177
    %p186 = scmp.eq.s32.totalorder %s17, 1
    %p187 = por %p185, %p186
    %p188 = scmp.ne.s32.totalorder %s177, %s178
    %p189 = scmp.eq.s32.totalorder %s17, 0
    %p190 = por %p188, %p189
    %p191 = scmp.ne.s32.totalorder %s177, %s178
    %p192 = scmp.eq.s32.totalorder %s18, 1
    %p193 = por %p191, %p192
    %p195 = scmp.ne.s32.totalorder %s178, %s194
    %p196 = scmp.eq.s32.totalorder %s18, 0
    %p197 = por %p195, %p196
    %p198 = scmp.le.s32.totalorder 1, %s12
    %p199 = scmp.lt.s32.totalorder %s12, 3
    %p200 = pnand %p198, %p199
    %p201 = pneg %p200
    // Predicated region
    $region9: #{contrastive_loss.1} parent=5 // pred_check
      _
    $region10: #{contrastive_loss.1} parent=5 // pred_check_branch
      %203 = sbr.rel (%p200) target = $region12
    $region11: #{contrastive_loss.1} parent=5 // pred_region
      %s204 = ssub.s32 %s12, 1
    $region12: #{contrastive_loss.1} parent=5 // pred_fallthru
      _
    %p205 = scmp.lt.s32.totalorder %s12, 2
    // Predicated region
    $region13: #{contrastive_loss.1} parent=5 // pred_check
      %p206 = pneg %p205
    $region14: #{contrastive_loss.1} parent=5 // pred_check_branch
      %208 = sbr.rel (%p206) target = $region16
    $region15: #{contrastive_loss.1} parent=5 // pred_region
      // Predicated region
      $region17: #{contrastive_loss.1} parent=15 // pred_check
        %p209 = pneg %p46
      $region18: #{contrastive_loss.1} parent=15 // pred_check_branch
        %211 = sbr.rel (%p209) target = $region20
      $region19: #{contrastive_loss.1} parent=15 // pred_region
        %p212 = scmp.lt.s32.totalorder %s19, 1
        %s213 = scalar_select %p212, %s19, 1
        %p214 = scmp.lt.s32.totalorder %s20, 0
        %s215 = scalar_select %p214, %s20, 0
        %s216 = smul.addr %s213, 4
        %s217 = sadd.s32 %s215, %s216
        %s218 = smul.addr %s217, 2
        %s219 = scalar_lea.vmem %s0, %s218
      $region20: #{contrastive_loss.1} parent=15 // pred_fallthru
        _
      // Predicated region
      $region21: #{contrastive_loss.1} parent=15 // pred_check
        %p220 = pneg %p74
      $region22: #{contrastive_loss.1} parent=15 // pred_check_branch
        %222 = sbr.rel (%p220) target = $region24
      $region23: #{contrastive_loss.1} parent=15 // pred_region
        %p223 = scmp.lt.s32.totalorder %s19, 1
        %s224 = scalar_select %p223, %s19, 1
        %p225 = scmp.lt.s32.totalorder %s20, 0
        %s226 = scalar_select %p225, %s20, 0
        %s227 = smul.addr %s224, 4
        %s228 = sadd.s32 %s226, %s227
        %s229 = smul.addr %s228, 2
        %s230 = scalar_lea.vmem %s1, %s229
      $region24: #{contrastive_loss.1} parent=15 // pred_fallthru
        _
      // Predicated region
      $region25: #{contrastive_loss.1} parent=15 // pred_check
        %p231 = pneg %p102
      $region26: #{contrastive_loss.1} parent=15 // pred_check_branch
        %233 = sbr.rel (%p231) target = $region28
      $region27: #{contrastive_loss.1} parent=15 // pred_region
        %p234 = scmp.lt.s32.totalorder %s19, 1
        %s235 = scalar_select %p234, %s19, 1
        %p236 = scmp.lt.s32.totalorder %s20, 0
        %s237 = scalar_select %p236, %s20, 0
        %s238 = smul.addr %s235, 4
        %s239 = sadd.s32 %s237, %s238
        %s240 = smul.addr %s239, 2
        %s241 = scalar_lea.vmem %s2, %s240
      $region28: #{contrastive_loss.1} parent=15 // pred_fallthru
        _
      // Predicated region
      $region29: #{contrastive_loss.1} parent=15 // pred_check
        %p242 = pneg %p130
      $region30: #{contrastive_loss.1} parent=15 // pred_check_branch
        %244 = sbr.rel (%p242) target = $region32
      $region31: #{contrastive_loss.1} parent=15 // pred_region
        %p245 = scmp.lt.s32.totalorder %s19, 1
        %s246 = scalar_select %p245, %s19, 1
        %p247 = scmp.lt.s32.totalorder %s20, 0
        %s248 = scalar_select %p247, %s20, 0
        %s249 = smul.addr %s246, 4
        %s250 = sadd.s32 %s248, %s249
        %s251 = smul.addr %s250, 2
        %s252 = scalar_lea.vmem %s3, %s251
      $region32: #{contrastive_loss.1} parent=15 // pred_fallthru
        _
    $region16: #{contrastive_loss.1} parent=5 // pred_fallthru
      _
    %p253 = scmp.le.s32.totalorder 1, %s12
    %p254 = scmp.lt.s32.totalorder %s12, 3
    %p255 = pnand %p253, %p254
    %p256 = pneg %p255
    // Predicated region
    $region33: #{contrastive_loss.1} parent=5 // pred_check
      _
    $region34: #{contrastive_loss.1} parent=5 // pred_check_branch
      %258 = sbr.rel (%p255) target = $region36
    $region35: #{contrastive_loss.1} parent=5 // pred_region
      %s259 = ssub.s32 %s12, 1
      %p260 = scmp.lt.s32.totalorder %s21, 1
      %s261 = scalar_select %p260, %s21, 1
      %p262 = scmp.lt.s32.totalorder %s22, 0
      %s263 = scalar_select %p262, %s22, 0
      %s264 = smul.addr %s261, 4
      %s265 = sadd.s32 %s263, %s264
      %s266 = smul.addr %s265, 2
      %s267 = scalar_lea.vmem %s0, %s266
      %p268 = pneg %p52
      %p269 = pneg %p49
      %p270 = scmp.lt.s32.totalorder %s21, 1
      %s271 = scalar_select %p270, %s21, 1
      %p272 = scmp.lt.s32.totalorder %s22, 0
      %s273 = scalar_select %p272, %s22, 0
      %s274 = smul.addr %s271, 4
      %s275 = sadd.s32 %s273, %s274
      %s276 = smul.addr %s275, 2
      %s277 = scalar_lea.vmem %s1, %s276
      %p278 = pneg %p80
      %p279 = pneg %p77
      %p280 = scmp.lt.s32.totalorder %s21, 1
      %s281 = scalar_select %p280, %s21, 1
      %p282 = scmp.lt.s32.totalorder %s22, 0
      %s283 = scalar_select %p282, %s22, 0
      %s284 = smul.addr %s281, 4
      %s285 = sadd.s32 %s283, %s284
      %s286 = smul.addr %s285, 2
      %s287 = scalar_lea.vmem %s2, %s286
      %p288 = pneg %p108
      %p289 = pneg %p105
      %p290 = scmp.lt.s32.totalorder %s21, 1
      %s291 = scalar_select %p290, %s21, 1
      %p292 = scmp.lt.s32.totalorder %s22, 0
      %s293 = scalar_select %p292, %s22, 0
      %s294 = smul.addr %s291, 4
      %s295 = sadd.s32 %s293, %s294
      %s296 = smul.addr %s295, 2
      %s297 = scalar_lea.vmem %s3, %s296
      %p298 = pneg %p136
      %p299 = pneg %p133
      %p300 = pneg %p164
      %p301 = pneg %p161
      %p302 = scmp.lt.s32.totalorder %s21, 1
      %s303 = scalar_select %p302, %s21, 1
      %p304 = scmp.lt.s32.totalorder %s22, 0
      %s305 = scalar_select %p304, %s22, 0
      %s306 = smul.addr %s303, 3
      %s307 = sadd.s32 %s305, %s306
      %s308 = smul.addr %s307, 2
      %s309 = scalar_lea.vmem %s4, %s308
      %p310 = pneg %p190
      %p311 = pneg %p187
      %p312 = scmp.lt.s32.totalorder %s21, 1
      %s313 = scalar_select %p312, %s21, 1
      %s314 = smul.addr %s313, 3
      %s315 = smul.addr %s314, 8
      %s316 = scalar_lea.vmem %s5, %s315
      %p317 = scmp.lt.s32.totalorder %s21, 1
      %s318 = scalar_select %p317, %s21, 1
      %p319 = scmp.lt.s32.totalorder %s22, 0
      %s320 = scalar_select %p319, %s22, 0
      %s321 = smul.addr %s318, 4
      %s322 = sadd.s32 %s320, %s321
      %s323 = smul.addr %s322, 2
      %s324 = scalar_lea.vmem %s0, %s323
      %p325 = scmp.lt.s32.totalorder %s21, 1
      %s326 = scalar_select %p325, %s21, 1
      %p327 = scmp.lt.s32.totalorder %s22, 0
      %s328 = scalar_select %p327, %s22, 0
      %s329 = smul.addr %s326, 4
      %s330 = sadd.s32 %s328, %s329
      %s331 = smul.addr %s330, 2
      %s332 = scalar_lea.vmem %s1, %s331
      %p333 = scmp.lt.s32.totalorder %s21, 1
      %s334 = scalar_select %p333, %s21, 1
      %p335 = scmp.lt.s32.totalorder %s22, 0
      %s336 = scalar_select %p335, %s22, 0
      %s337 = smul.addr %s334, 4
      %s338 = sadd.s32 %s336, %s337
      %s339 = smul.addr %s338, 2
      %s340 = scalar_lea.vmem %s2, %s339
      %p341 = scmp.lt.s32.totalorder %s21, 1
      %s342 = scalar_select %p341, %s21, 1
      %p343 = scmp.lt.s32.totalorder %s22, 0
      %s344 = scalar_select %p343, %s22, 0
      %s345 = smul.addr %s342, 4
      %s346 = sadd.s32 %s344, %s345
      %s347 = smul.addr %s346, 2
      %s348 = scalar_lea.vmem %s3, %s347
      %p349 = scmp.lt.s32.totalorder %s21, 1
      %s350 = scalar_select %p349, %s21, 1
      %p351 = scmp.lt.s32.totalorder %s22, 0
      %s352 = scalar_select %p351, %s22, 0
      %s353 = smul.addr %s350, 3
      %s354 = sadd.s32 %s352, %s353
      %s355 = smul.addr %s354, 2
      %s356 = scalar_lea.vmem %s4, %s355
      %p357 = scmp.lt.s32.totalorder %s21, 1
      %s358 = scalar_select %p357, %s21, 1
      %s359 = smul.addr %s358, 3
      %s360 = smul.addr %s359, 8
      %s361 = scalar_lea.vmem %s5, %s360
      %v362 = vld [vmem:[%s324] sm:$0x3]
      %v363 = vld [vmem:[%s324 + $0x2] sm:$0x3]
      %v364 = vld [vmem:[%s324 + $0x4] sm:$0x3]
      %v365 = vld [vmem:[%s324 + $0x6] sm:$0x3]
      %v366 = vld [vmem:[%s332] sm:$0x3]
      %v367 = vld [vmem:[%s332 + $0x2] sm:$0x3]
      %v368 = vld [vmem:[%s332 + $0x4] sm:$0x3]
      %v369 = vld [vmem:[%s332 + $0x6] sm:$0x3]
      %v370 = vld [vmem:[%s340] sm:$0x3]
      %v371 = vld [vmem:[%s340 + $0x2] sm:$0x3]
      %v372 = vld [vmem:[%s340 + $0x4] sm:$0x3]
      %v373 = vld [vmem:[%s340 + $0x6] sm:$0x3]
      %v374 = vld [vmem:[%s348] sm:$0x3]
      %v375 = vld [vmem:[%s348 + $0x2] sm:$0x3]
      %v376 = vld [vmem:[%s348 + $0x4] sm:$0x3]
      %v377 = vld [vmem:[%s348 + $0x6] sm:$0x3]
      %v378 = vmul.f32 %v362, %v362
      %v379 = vmul.f32 %v363, %v363
      %v380 = vmul.f32 %v364, %v364
      %v381 = vmul.f32 %v365, %v365
      %vm382 = vcmask 1041408
      %v383 = vsel %vm382, %v378, 0.0
      %v384 = vsel %vm382, %v379, 0.0
      %v385 = vadd.f32 %v383, %v384
      %v386 = vsel %vm382, %v380, 0.0
      %v387 = vadd.f32 %v385, %v386
      %v388 = vsel %vm382, %v381, 0.0
      %v389 = vadd.f32 %v387, %v388
      %v390 = vmax.f32 %v389, 1e-24
      %v391 = vrsqrt.pop %v390
      %v392 = vmul.f32 %v366, %v366
      %v393 = vmul.f32 %v367, %v367
      %v394 = vmul.f32 %v368, %v368
      %v395 = vmul.f32 %v369, %v369
      %v396 = vsel %vm382, %v392, 0.0
      %v397 = vsel %vm382, %v393, 0.0
      %v398 = vadd.f32 %v396, %v397
      %v399 = vsel %vm382, %v394, 0.0
      %v400 = vadd.f32 %v398, %v399
      %v401 = vsel %vm382, %v395, 0.0
      %v402 = vadd.f32 %v400, %v401
      %v403 = vmax.f32 %v402, 1e-24
      %v404 = vrsqrt.pop %v403
      %v405 = vmul.f32 %v370, %v370
      %v406 = vmul.f32 %v371, %v371
      %v407 = vmul.f32 %v372, %v372
      %v408 = vmul.f32 %v373, %v373
      %v409 = vsel %vm382, %v405, 0.0
      %v410 = vsel %vm382, %v406, 0.0
      %v411 = vadd.f32 %v409, %v410
      %v412 = vsel %vm382, %v407, 0.0
      %v413 = vadd.f32 %v411, %v412
      %v414 = vsel %vm382, %v408, 0.0
      %v415 = vadd.f32 %v413, %v414
      %v416 = vmax.f32 %v415, 1e-24
      %v417 = vrsqrt.pop %v416
      %v418 = vmul.f32 %v374, %v374
      %v419 = vmul.f32 %v375, %v375
      %v420 = vmul.f32 %v376, %v376
      %v421 = vmul.f32 %v377, %v377
      %v422 = vsel %vm382, %v418, 0.0
      %v423 = vsel %vm382, %v419, 0.0
      %v424 = vadd.f32 %v422, %v423
      %v425 = vsel %vm382, %v420, 0.0
      %v426 = vadd.f32 %v424, %v425
      %v427 = vsel %vm382, %v421, 0.0
      %v428 = vadd.f32 %v426, %v427
      %v429 = vmax.f32 %v428, 1e-24
      %v430 = vrsqrt.pop %v429
      %v431 = vmul.f32 %v362, %v374
      %v432 = vmul.f32 %v363, %v375
      %v433 = vmul.f32 %v364, %v376
      %v434 = vmul.f32 %v365, %v377
      %v435 = vsel %vm382, %v431, 0.0
      %v436 = vsel %vm382, %v432, 0.0
      %v437 = vadd.f32 %v435, %v436
      %v438 = vsel %vm382, %v433, 0.0
      %v439 = vadd.f32 %v437, %v438
      %v440 = vsel %vm382, %v434, 0.0
      %v441 = vadd.f32 %v439, %v440
      %v442 = vmul.f32 %v441, %v391
      %v443 = vmul.f32 %v442, %v430
      %v444 = vmul.f32 %v443, 14.285714
      %v445 = vmax.f32 %v444, -50.0
      %v446 = vmin.f32 %v445, 50.0
      %447 = vst [vmem:[%s356] sm:$0x3] %v446
      %v448 = vmul.f32 %v366, %v374
      %v449 = vmul.f32 %v367, %v375
      %v450 = vmul.f32 %v368, %v376
      %v451 = vmul.f32 %v369, %v377
      %v452 = vsel %vm382, %v448, 0.0
      %v453 = vsel %vm382, %v449, 0.0
      %v454 = vadd.f32 %v452, %v453
      %v455 = vsel %vm382, %v450, 0.0
      %v456 = vadd.f32 %v454, %v455
      %v457 = vsel %vm382, %v451, 0.0
      %v458 = vadd.f32 %v456, %v457
      %v459 = vmul.f32 %v458, %v404
      %v460 = vmul.f32 %v459, %v430
      %v461 = vmul.f32 %v460, 14.285714
      %v462 = vmax.f32 %v461, -50.0
      %v463 = vmin.f32 %v462, 50.0
      %s464 = scalar_lea.vmem %s356, 2
      %465 = vst [vmem:[%s464] sm:$0x3] %v463
      %v466 = vmul.f32 %v370, %v374
      %v467 = vmul.f32 %v371, %v375
      %v468 = vmul.f32 %v372, %v376
      %v469 = vmul.f32 %v373, %v377
      %v470 = vsel %vm382, %v466, 0.0
      %v471 = vsel %vm382, %v467, 0.0
      %v472 = vadd.f32 %v470, %v471
      %v473 = vsel %vm382, %v468, 0.0
      %v474 = vadd.f32 %v472, %v473
      %v475 = vsel %vm382, %v469, 0.0
      %v476 = vadd.f32 %v474, %v475
      %v477 = vmul.f32 %v476, %v417
      %v478 = vmul.f32 %v477, %v430
      %v479 = vmul.f32 %v478, 14.285714
      %v480 = vmax.f32 %v479, -50.0
      %v481 = vmin.f32 %v480, 50.0
      %s482 = scalar_lea.vmem %s356, 4
      %483 = vst [vmem:[%s482] sm:$0x3] %v481
      %p484 = scmp.eq.s32.totalorder %s22, 0
      // Predicated region
      $region37: #{contrastive_loss.1} parent=35 // pred_check
        %p485 = pneg %p484
      $region38: #{contrastive_loss.1} parent=35 // pred_check_branch
        %487 = sbr.rel (%p485) target = $region40
      $region39: #{contrastive_loss.1} parent=35 // pred_region
        %488 = vst [vmem:[%s361] sm:$0xff] 0.0
        %489 = vst [vmem:[%s361 + $0x8] sm:$0xff] 0.0
        %490 = vst [vmem:[%s361 + $0x10] sm:$0xff] 0.0
      $region40: #{contrastive_loss.1} parent=35 // pred_fallthru
        _
      %v491 = vmul.f32 %v362, %v370
      %v492 = vmul.f32 %v363, %v371
      %v493 = vmul.f32 %v364, %v372
      %v494 = vmul.f32 %v365, %v373
      %v495 = vsel %vm382, %v491, 0.0
      %v496 = vsel %vm382, %v492, 0.0
      %v497 = vadd.f32 %v495, %v496
      %v498 = vsel %vm382, %v493, 0.0
      %v499 = vadd.f32 %v497, %v498
      %v500 = vsel %vm382, %v494, 0.0
      %v501 = vadd.f32 %v499, %v500
      %v502 = vmul.f32 %v501, %v391
      %v503 = vmul.f32 %v502, %v417
      %v504 = vmul.f32 %v503, 14.285714
      %v505 = vmax.f32 %v504, -50.0
      %v506 = vmin.f32 %v505, 50.0
      %v507 = vmul.f32 %v506, 1.442695
      %v508 = vpow.pop %v507
      %v509 = vld [vmem:[%s361] sm:$0x1]
      %v510 = vsel %vm382, %v508, 0.0
      %v511 = vrot.slane %v510, 4
      %v512 = vadd.f32 %v510, %v511
      %v513 = vrot.slane %v512, 2
      %v514 = vadd.f32 %v512, %v513
      %v515 = vrot.slane %v514, 1
      %v516 = vadd.f32 %v514, %v515
      %v517 = vadd.f32 %v509, %v516
      %518 = vst [vmem:[%s361] sm:$0x1] %v517
      %v519 = vmul.f32 %v366, %v362
      %v520 = vmul.f32 %v367, %v363
      %v521 = vmul.f32 %v368, %v364
      %v522 = vmul.f32 %v369, %v365
      %v523 = vsel %vm382, %v519, 0.0
      %v524 = vsel %vm382, %v520, 0.0
      %v525 = vadd.f32 %v523, %v524
      %v526 = vsel %vm382, %v521, 0.0
      %v527 = vadd.f32 %v525, %v526
      %v528 = vsel %vm382, %v522, 0.0
      %v529 = vadd.f32 %v527, %v528
      %v530 = vmul.f32 %v529, %v404
      %v531 = vmul.f32 %v530, %v391
      %v532 = vmul.f32 %v531, 14.285714
      %v533 = vmax.f32 %v532, -50.0
      %v534 = vmin.f32 %v533, 50.0
      %v535 = vmul.f32 %v534, 1.442695
      %v536 = vpow.pop %v535
      %s537 = scalar_lea.vmem %s361, 8
      %v538 = vld [vmem:[%s537] sm:$0x1]
      %v539 = vsel %vm382, %v536, 0.0
      %v540 = vrot.slane %v539, 4
      %v541 = vadd.f32 %v539, %v540
      %v542 = vrot.slane %v541, 2
      %v543 = vadd.f32 %v541, %v542
      %v544 = vrot.slane %v543, 1
      %v545 = vadd.f32 %v543, %v544
      %v546 = vadd.f32 %v538, %v545
      %547 = vst [vmem:[%s537] sm:$0x1] %v546
      %v548 = vmul.f32 %v370, %v366
      %v549 = vmul.f32 %v371, %v367
      %v550 = vmul.f32 %v372, %v368
      %v551 = vmul.f32 %v373, %v369
      %v552 = vsel %vm382, %v548, 0.0
      %v553 = vsel %vm382, %v549, 0.0
      %v554 = vadd.f32 %v552, %v553
      %v555 = vsel %vm382, %v550, 0.0
      %v556 = vadd.f32 %v554, %v555
      %v557 = vsel %vm382, %v551, 0.0
      %v558 = vadd.f32 %v556, %v557
      %v559 = vmul.f32 %v558, %v417
      %v560 = vmul.f32 %v559, %v404
      %v561 = vmul.f32 %v560, 14.285714
      %v562 = vmax.f32 %v561, -50.0
      %v563 = vmin.f32 %v562, 50.0
      %v564 = vmul.f32 %v563, 1.442695
      %v565 = vpow.pop %v564
      %s566 = scalar_lea.vmem %s361, 16
      %v567 = vld [vmem:[%s566] sm:$0x1]
      %v568 = vsel %vm382, %v565, 0.0
      %v569 = vrot.slane %v568, 4
      %v570 = vadd.f32 %v568, %v569
      %v571 = vrot.slane %v570, 2
      %v572 = vadd.f32 %v570, %v571
      %v573 = vrot.slane %v572, 1
      %v574 = vadd.f32 %v572, %v573
      %v575 = vadd.f32 %v567, %v574
      %576 = vst [vmem:[%s566] sm:$0x1] %v575
      %p577 = scmp.lt.s32.totalorder %s21, 1
      %s578 = scalar_select %p577, %s21, 1
      %p579 = scmp.lt.s32.totalorder %s22, 0
      %s580 = scalar_select %p579, %s22, 0
      %s581 = smul.addr %s578, 3
      %s582 = sadd.s32 %s580, %s581
      %s583 = smul.addr %s582, 2
      %s584 = scalar_lea.vmem %s4, %s583
      %p585 = scmp.lt.s32.totalorder %s21, 1
      %s586 = scalar_select %p585, %s21, 1
      %s587 = smul.addr %s586, 3
      %s588 = smul.addr %s587, 8
      %s589 = scalar_lea.vmem %s5, %s588
      // Predicated region
      $region41: #{contrastive_loss.1} parent=35 // pred_check
        %p590 = pneg %p161
      $region42: #{contrastive_loss.1} parent=35 // pred_check_branch
        %592 = sbr.rel (%p590) target = $region44
      $region43: #{contrastive_loss.1} parent=35 // pred_region
        _
      $region44: #{contrastive_loss.1} parent=35 // pred_fallthru
        _
      // Predicated region
      $region45: #{contrastive_loss.1} parent=35 // pred_check
        %p593 = pneg %p187
      $region46: #{contrastive_loss.1} parent=35 // pred_check_branch
        %595 = sbr.rel (%p593) target = $region48
      $region47: #{contrastive_loss.1} parent=35 // pred_region
        _
      $region48: #{contrastive_loss.1} parent=35 // pred_fallthru
        _
    $region36: #{contrastive_loss.1} parent=5 // pred_fallthru
      _
    %p596 = scmp.le.s32.totalorder 2, %s12
    // Predicated region
    $region49: #{contrastive_loss.1} parent=5 // pred_check
      %p597 = pneg %p596
    $region50: #{contrastive_loss.1} parent=5 // pred_check_branch
      %599 = sbr.rel (%p597) target = $region52
    $region51: #{contrastive_loss.1} parent=5 // pred_region
      %s600 = ssub.s32 %s12, 2
      // Predicated region
      $region53: #{contrastive_loss.1} parent=51 // pred_check
        %p601 = pneg %p167
      $region54: #{contrastive_loss.1} parent=51 // pred_check_branch
        %603 = sbr.rel (%p601) target = $region56
      $region55: #{contrastive_loss.1} parent=51 // pred_region
        %p604 = scmp.lt.s32.totalorder %s23, 1
        %s605 = scalar_select %p604, %s23, 1
        %p606 = scmp.lt.s32.totalorder %s24, 0
        %s607 = scalar_select %p606, %s24, 0
        %s608 = smul.addr %s605, 3
        %s609 = sadd.s32 %s607, %s608
        %s610 = smul.addr %s609, 2
        %s611 = scalar_lea.vmem %s4, %s610
      $region56: #{contrastive_loss.1} parent=51 // pred_fallthru
        _
      // Predicated region
      $region57: #{contrastive_loss.1} parent=51 // pred_check
        %p612 = pneg %p193
      $region58: #{contrastive_loss.1} parent=51 // pred_check_branch
        %614 = sbr.rel (%p612) target = $region60
      $region59: #{contrastive_loss.1} parent=51 // pred_region
        %p615 = scmp.lt.s32.totalorder %s23, 1
        %s616 = scalar_select %p615, %s23, 1
        %s617 = smul.addr %s616, 3
        %s618 = smul.addr %s617, 8
        %s619 = scalar_lea.vmem %s5, %s618
      $region60: #{contrastive_loss.1} parent=51 // pred_fallthru
        _
    $region52: #{contrastive_loss.1} parent=5 // pred_fallthru
      _
  $region6: #{contrastive_loss.1} parent=0 // loop_footer
    %s16 = sadd.s32 1, %s12
  $region7: #{contrastive_loss.1} parent=0 // loop_footer_branch
    %11 = sbr.rel target = $region3
  $region8: #{contrastive_loss.1} parent=0 // loop_exit
    _

</llo_original>
